<compile_context>
chip_gen: v5e
topology: v5e:2x2
jax: 0.10.0
libtpu: 0.0.40
codegen_flags: <defaults>
</compile_context>

<pallas_src>
import functools

import jax
import jax.numpy as jnp
from jax.experimental import pallas as pl
from jax.experimental.pallas import tpu as pltpu

_LANE = 128
_SUBLANE_BY_ITEMSIZE = {4: 8, 2: 16, 1: 32}


def _round_up(x, m):
    return (x + m - 1) // m * m


def _pad_to(a, shape):
    pads = [(0, t - s) for s, t in zip(a.shape, shape)]
    if all(p == (0, 0) for p in pads):
        return a
    return jnp.pad(a, pads)


def _vmem_capacity_bytes():
    # Generation-aware physical VMEM (64 MiB/TC on v7x, 128 MiB on v5e/v6e).
    try:
        return int(pltpu.get_tpu_info().vmem_capacity_bytes)
    except Exception:
        return 64 << 20  # conservative fallback (v7x per-TensorCore VMEM)


def _mlp_kernel(x_ref, w1_ref, b1_ref, w2_ref, b2_ref, w3_ref, b3_ref, o_ref):
    # fc1 + ReLU (MXU matmul with f32 accumulation; K = true input_dim).
    h = jnp.dot(x_ref[...], w1_ref[...], preferred_element_type=jnp.float32)
    h = jnp.maximum(h + b1_ref[...].astype(jnp.float32), 0.0)
    # fc2 + ReLU.
    h = jnp.dot(h.astype(w2_ref.dtype), w2_ref[...],
                preferred_element_type=jnp.float32)
    h = jnp.maximum(h + b2_ref[...].astype(jnp.float32), 0.0)
    # fc3 (no activation). Output tile is lane-dense (padded to 128 lanes).
    h = jnp.dot(h.astype(w3_ref.dtype), w3_ref[...],
                preferred_element_type=jnp.float32)
    o_ref[...] = (h + b3_ref[...].astype(jnp.float32)).astype(o_ref.dtype)


def pad_mlp_params(w1, b1, w2, b2, w3, b3):
    """Pad output feature dims to 128 lanes ONCE at init (hoisted out of the
    per-call path). w1's K dim stays unpadded so x never needs feature padding.
    Returns (padded_params, true_output_dim)."""
    in_dim, hid = w1.shape
    hid2 = w2.shape[1]
    out_dim = w3.shape[1]
    h1_p = _round_up(hid, _LANE)
    h2_p = _round_up(hid2, _LANE)
    out_p = _round_up(out_dim, _LANE)
    # Zero padding is exact: padded hidden units see zero weights + zero bias
    # (ReLU(0)=0), padded output columns are sliced away by the caller.
    params = (
        _pad_to(w1, (in_dim, h1_p)), _pad_to(b1, (1, h1_p)),
        _pad_to(w2, (h1_p, h2_p)),   _pad_to(b2, (1, h2_p)),
        _pad_to(w3, (h2_p, out_p)),  _pad_to(b3, (1, out_p)),
    )
    return params, out_dim


@functools.partial(jax.jit, static_argnames=("out_dim", "block_b"))
def mlp_forward(x, params, out_dim, *, block_b=512):
    """x: (B, input_dim); params: padded weights from pad_mlp_params.
    Returns (B, out_dim)."""
    w1_p, b1_p, w2_p, b2_p, w3_p, b3_p = params
    B, in_dim = x.shape
    assert w1_p.shape[0] == in_dim, "w1 K dim must match x feature dim"
    h1_p = w1_p.shape[1]
    h2_p = w2_p.shape[1]
    out_p = w3_p.shape[1]
    dtype = x.dtype
    itemsize = jnp.dtype(dtype).itemsize
    sublane = _SUBLANE_BY_ITEMSIZE.get(itemsize, 8)

    # ---- Batch tile choice ----------------------------------------------
    # Large tiles amortize the ~0.35us/step overhead (512 ~ 85% of the
    # streamed-tile HBM roofline on v6e), but we also want >= 8 grid steps so
    # a 2-TC v7x gets >= 4 pipelined steps per core for DMA/compute overlap.
    min_steps = 8
    bb_cap = _round_up(max(block_b, sublane), sublane)
    bb_steps = _round_up(max(pl.cdiv(B, min_steps), 1), sublane)
    bb = max(sublane, min(bb_cap, bb_steps))

    # ---- VMEM budget (generation-aware) -----------------------------------
    vmem_cap = int(0.75 * _vmem_capacity_bytes())  # ~48 MiB v7x, ~96 MiB v5e/v6e
    w_bytes = sum(int(p.size) * jnp.dtype(p.dtype).itemsize
                  for p in (w1_p, b1_p, w2_p, b2_p, w3_p, b3_p))

    def _needed(bb_):
        io = 2 * bb_ * (in_dim + out_p) * itemsize      # double-buffered x / out
        act = bb_ * (h1_p + h2_p + out_p) * 4           # f32 intermediates in VMEM
        return w_bytes + io + act + (4 << 20)           # + compiler scratch slack

    while _needed(bb) > vmem_cap and bb > sublane:
        bb = max(sublane, _round_up(bb // 2, sublane))
    if _needed(bb) > vmem_cap:
        # TODO(synk): stream w1/w2/w3 via a hidden-dim grid axis instead of
        # keeping all three layers VMEM-resident (needed for large layers on v7x).
        raise ValueError("MLP weights + activations exceed the VMEM budget; "
                         "hidden-dim tiling not implemented yet.")
    vmem_limit = int(min(vmem_cap, max(_needed(bb), min(32 << 20, vmem_cap))))

    # Pad batch only (no-op when B is already a multiple of bb).
    B_p = _round_up(B, bb)
    x_p = _pad_to(x, (B_p, in_dim))
    grid = (B_p // bb,)

    flops = 2 * B_p * (in_dim * h1_p + h1_p * h2_p + h2_p * out_p)
    bytes_accessed = (x_p.size * itemsize + w_bytes + B_p * out_p * itemsize)
    cost = pl.CostEstimate(flops=flops, transcendentals=0,
                           bytes_accessed=bytes_accessed)

    out_padded = pl.pallas_call(
        _mlp_kernel,
        out_shape=jax.ShapeDtypeStruct((B_p, out_p), dtype),
        grid_spec=pltpu.PrefetchScalarGridSpec(
            num_scalar_prefetch=0,
            grid=grid,
            in_specs=[
                # x: stream batch tiles; last block dim == full array dim, so
                # no feature padding / no extra HBM traffic.
                pl.BlockSpec((bb, in_dim), lambda i: (i, 0)),
                # weights / biases: constant block index -> DMA'd once and kept
                # VMEM-resident; Buffered(1) avoids a pointless second buffer.
                pl.BlockSpec((in_dim, h1_p), lambda i: (0, 0),
                             pipeline_mode=pl.Buffered(1)),
                pl.BlockSpec((1, h1_p), lambda i: (0, 0),
                             pipeline_mode=pl.Buffered(1)),
                pl.BlockSpec((h1_p, h2_p), lambda i: (0, 0),
                             pipeline_mode=pl.Buffered(1)),
                pl.BlockSpec((1, h2_p), lambda i: (0, 0),
                             pipeline_mode=pl.Buffered(1)),
                pl.BlockSpec((h2_p, out_p), lambda i: (0, 0),
                             pipeline_mode=pl.Buffered(1)),
                pl.BlockSpec((1, out_p), lambda i: (0, 0),
                             pipeline_mode=pl.Buffered(1)),
            ],
            # Lane-dense output tile (unmasked vst stores).
            out_specs=pl.BlockSpec((bb, out_p), lambda i: (i, 0)),
        ),
        compiler_params=pltpu.CompilerParams(
            dimension_semantics=("parallel",),
            vmem_limit_bytes=vmem_limit,
        ),
        cost_estimate=cost,
    )(x_p, w1_p, b1_p, w2_p, b2_p, w3_p, b3_p)

    return out_padded[:B, :out_dim]


def init_linear(key, fan_in, fan_out, dtype=jnp.float32):
    """PyTorch-style uniform(-1/sqrt(fan_in), 1/sqrt(fan_in)) init.
    Weight returned as (fan_in, fan_out) (transposed vs torch), bias (1, fan_out)."""
    kw, kb = jax.random.split(key)
    bound = 1.0 / (fan_in ** 0.5)
    w = jax.random.uniform(kw, (fan_in, fan_out), jnp.float32, -bound, bound)
    b = jax.random.uniform(kb, (1, fan_out), jnp.float32, -bound, bound)
    return w.astype(dtype), b.astype(dtype)


def _reference(x, w1, b1, w2, b2, w3, b3):
    h = jnp.maximum(x.astype(jnp.float32) @ w1.astype(jnp.float32)
                    + b1.astype(jnp.float32), 0.0)
    h = jnp.maximum(h @ w2.astype(jnp.float32) + b2.astype(jnp.float32), 0.0)
    return h @ w3.astype(jnp.float32) + b3.astype(jnp.float32)


if __name__ == "__main__":
    # Module-consistent small shapes: input_dim=16, hidden_dim=32, output_dim=8.
    # batch=512 -> bb=64, grid=(8,): deep enough pipeline for both v7x cores.
    batch, input_dim, hidden_dim, output_dim = 512, 16, 32, 8

    key = jax.random.PRNGKey(0)
    kx, k1, k2, k3 = jax.random.split(key, 4)

    x = jax.random.normal(kx, (batch, input_dim), jnp.float32)
    w1, b1 = init_linear(k1, input_dim, hidden_dim)
    w2, b2 = init_linear(k2, hidden_dim, hidden_dim // 2)
    w3, b3 = init_linear(k3, hidden_dim // 2, output_dim)

    # f32 run: exact-semantics check (padding done once, outside the hot path).
    params_f32, out_dim = pad_mlp_params(w1, b1, w2, b2, w3, b3)
    out = mlp_forward(x, params_f32, out_dim)
    out = jax.block_until_ready(out)
    ref = _reference(x, w1, b1, w2, b2, w3, b3)
    assert out.shape == (batch, output_dim)
    assert jnp.allclose(out, ref, atol=1e-5, rtol=1e-5)

    # bf16 run (v6e/v7x MXU-peak path): bf16 inputs/weights, f32 accumulation.
    bf = jnp.bfloat16
    params_bf, _ = pad_mlp_params(*(p.astype(bf)
                                    for p in (w1, b1, w2, b2, w3, b3)))
    out_bf = mlp_forward(x.astype(bf), params_bf, out_dim)
    out_bf = jax.block_until_ready(out_bf)
    assert out_bf.shape == (batch, output_dim)
    assert jnp.allclose(out_bf.astype(jnp.float32), ref, atol=5e-2, rtol=5e-2)

    print("KERNEL_OK")
</pallas_src>

<mosaic_0001>
module attributes {stable_mosaic.version = 11 : i64} {
  func.func @_mlp_kernel(%arg0: i32, %arg1: memref<64x16xf32, #tpu.memory_space<vmem>>, %arg2: memref<16x128xf32, #tpu.memory_space<vmem>>, %arg3: memref<1x128xf32, #tpu.memory_space<vmem>>, %arg4: memref<128x128xf32, #tpu.memory_space<vmem>>, %arg5: memref<1x128xf32, #tpu.memory_space<vmem>>, %arg6: memref<128x128xf32, #tpu.memory_space<vmem>>, %arg7: memref<1x128xf32, #tpu.memory_space<vmem>>, %arg8: memref<64x128xf32, #tpu.memory_space<vmem>>) attributes {dimension_semantics = [#tpu.dimension_semantics<parallel>], iteration_bounds = array<i64: 8>, scalar_prefetch = 0 : i64, scratch_operands = 0 : i64, tpu.core_type = #tpu.core_type<tc>, window_params = [{transform_indices = @transform_0, window_bounds = array<i64: 64, 16>}, {pipeline_mode = #tpu.pipeline_mode<synchronous>, transform_indices = @transform_1, window_bounds = array<i64: 16, 128>}, {pipeline_mode = #tpu.pipeline_mode<synchronous>, transform_indices = @transform_2, window_bounds = array<i64: 1, 128>}, {pipeline_mode = #tpu.pipeline_mode<synchronous>, transform_indices = @transform_3, window_bounds = array<i64: 128, 128>}, {pipeline_mode = #tpu.pipeline_mode<synchronous>, transform_indices = @transform_4, window_bounds = array<i64: 1, 128>}, {pipeline_mode = #tpu.pipeline_mode<synchronous>, transform_indices = @transform_5, window_bounds = array<i64: 128, 128>}, {pipeline_mode = #tpu.pipeline_mode<synchronous>, transform_indices = @transform_6, window_bounds = array<i64: 1, 128>}, {transform_indices = @transform_7, window_bounds = array<i64: 64, 128>}]} {
    %c0 = arith.constant 0 : index
    %c0_0 = arith.constant 0 : index
    %0 = vector.load %arg1[%c0, %c0_0] : memref<64x16xf32, #tpu.memory_space<vmem>>, vector<64x16xf32>
    %c0_1 = arith.constant 0 : index
    %c0_2 = arith.constant 0 : index
    %1 = vector.load %arg2[%c0_1, %c0_2] : memref<16x128xf32, #tpu.memory_space<vmem>>, vector<16x128xf32>
    %cst = arith.constant dense<0.000000e+00> : vector<64x128xf32>
    %2 = tpu.matmul %0, %1, %cst {dimension_numbers = #tpu.dot_dimension_numbers<[1], [0], [0], [1], [0, 0, 1, 1], [], []>} : vector<64x16xf32>, vector<16x128xf32>, vector<64x128xf32> -> vector<64x128xf32>
    %c0_3 = arith.constant 0 : index
    %c0_4 = arith.constant 0 : index
    %3 = vector.load %arg3[%c0_3, %c0_4] : memref<1x128xf32, #tpu.memory_space<vmem>>, vector<1x128xf32>
    %4 = vector.broadcast %3 : vector<1x128xf32> to vector<64x128xf32>
    %5 = arith.addf %2, %4 : vector<64x128xf32>
    %cst_5 = arith.constant 0.000000e+00 : f32
    %6 = vector.broadcast %cst_5 : f32 to vector<64x128xf32>
    %7 = arith.maximumf %5, %6 : vector<64x128xf32>
    %c0_6 = arith.constant 0 : index
    %c0_7 = arith.constant 0 : index
    %8 = vector.load %arg4[%c0_6, %c0_7] : memref<128x128xf32, #tpu.memory_space<vmem>>, vector<128x128xf32>
    %cst_8 = arith.constant dense<0.000000e+00> : vector<64x128xf32>
    %9 = tpu.matmul %7, %8, %cst_8 {dimension_numbers = #tpu.dot_dimension_numbers<[1], [0], [0], [1], [0, 0, 1, 1], [], []>} : vector<64x128xf32>, vector<128x128xf32>, vector<64x128xf32> -> vector<64x128xf32>
    %c0_9 = arith.constant 0 : index
    %c0_10 = arith.constant 0 : index
    %10 = vector.load %arg5[%c0_9, %c0_10] : memref<1x128xf32, #tpu.memory_space<vmem>>, vector<1x128xf32>
    %11 = vector.broadcast %10 : vector<1x128xf32> to vector<64x128xf32>
    %12 = arith.addf %9, %11 : vector<64x128xf32>
    %cst_11 = arith.constant 0.000000e+00 : f32
    %13 = vector.broadcast %cst_11 : f32 to vector<64x128xf32>
    %14 = arith.maximumf %12, %13 : vector<64x128xf32>
    %c0_12 = arith.constant 0 : index
    %c0_13 = arith.constant 0 : index
    %15 = vector.load %arg6[%c0_12, %c0_13] : memref<128x128xf32, #tpu.memory_space<vmem>>, vector<128x128xf32>
    %cst_14 = arith.constant dense<0.000000e+00> : vector<64x128xf32>
    %16 = tpu.matmul %14, %15, %cst_14 {dimension_numbers = #tpu.dot_dimension_numbers<[1], [0], [0], [1], [0, 0, 1, 1], [], []>} : vector<64x128xf32>, vector<128x128xf32>, vector<64x128xf32> -> vector<64x128xf32>
    %c0_15 = arith.constant 0 : index
    %c0_16 = arith.constant 0 : index
    %17 = vector.load %arg7[%c0_15, %c0_16] : memref<1x128xf32, #tpu.memory_space<vmem>>, vector<1x128xf32>
    %18 = vector.broadcast %17 : vector<1x128xf32> to vector<64x128xf32>
    %19 = arith.addf %16, %18 : vector<64x128xf32>
    %c0_17 = arith.constant 0 : index
    %c0_18 = arith.constant 0 : index
    %20 = vector.load %arg8[%c0_17, %c0_18] : memref<64x128xf32, #tpu.memory_space<vmem>>, vector<64x128xf32>
    tpu.vector_store %arg8[%c0_17, %c0_18], %19 {strides = array<i32>} : memref<64x128xf32, #tpu.memory_space<vmem>>, vector<64x128xf32>,
    return
  }
  func.func @transform_0(%arg0: i32) -> (i32, i32) {
    %c0_i32 = arith.constant 0 : i32
    %c0_i32_0 = arith.constant 0 : i32
    return %arg0, %c0_i32 : i32, i32
  }
  func.func @transform_1(%arg0: i32) -> (i32, i32) {
    %c0_i32 = arith.constant 0 : i32
    %c0_i32_0 = arith.constant 0 : i32
    %c0_i32_1 = arith.constant 0 : i32
    return %c0_i32, %c0_i32_0 : i32, i32
  }
  func.func @transform_2(%arg0: i32) -> (i32, i32) {
    %c0_i32 = arith.constant 0 : i32
    %c0_i32_0 = arith.constant 0 : i32
    %c0_i32_1 = arith.constant 0 : i32
    return %c0_i32, %c0_i32_0 : i32, i32
  }
  func.func @transform_3(%arg0: i32) -> (i32, i32) {
    %c0_i32 = arith.constant 0 : i32
    %c0_i32_0 = arith.constant 0 : i32
    %c0_i32_1 = arith.constant 0 : i32
    return %c0_i32, %c0_i32_0 : i32, i32
  }
  func.func @transform_4(%arg0: i32) -> (i32, i32) {
    %c0_i32 = arith.constant 0 : i32
    %c0_i32_0 = arith.constant 0 : i32
    %c0_i32_1 = arith.constant 0 : i32
    return %c0_i32, %c0_i32_0 : i32, i32
  }
  func.func @transform_5(%arg0: i32) -> (i32, i32) {
    %c0_i32 = arith.constant 0 : i32
    %c0_i32_0 = arith.constant 0 : i32
    %c0_i32_1 = arith.constant 0 : i32
    return %c0_i32, %c0_i32_0 : i32, i32
  }
  func.func @transform_6(%arg0: i32) -> (i32, i32) {
    %c0_i32 = arith.constant 0 : i32
    %c0_i32_0 = arith.constant 0 : i32
    %c0_i32_1 = arith.constant 0 : i32
    return %c0_i32, %c0_i32_0 : i32, i32
  }
  func.func @transform_7(%arg0: i32) -> (i32, i32) {
    %c0_i32 = arith.constant 0 : i32
    %c0_i32_0 = arith.constant 0 : i32
    return %arg0, %c0_i32 : i32, i32
  }
}

</mosaic_0001>

<llo_original>
// kernel: mlp_forward.1
$region0: #{mlp_forward.1}
  #allocation0 [shape = 'u32[]', space=smem, size = 0x4, offset = 0x4, fixed_abs, tag = 'smem constant byte address 0x4 - core index']
  #allocation1 [shape = 'u32[72,128]{1,0:T(1,128)}', space=vmem, size = 0x9000, scoped, tag = 'internal scratch']
  %s0 = inlined_call_operand.vmem [shape: f32[512,16], index: 0, kind: input, shape index: {}]
  %s1 = inlined_call_operand.vmem [shape: f32[16,128], index: 1, kind: input, shape index: {}]
  %s2 = inlined_call_operand.vmem [shape: f32[1,128], index: 2, kind: input, shape index: {}]
  %s3 = inlined_call_operand.vmem [shape: f32[128,128], index: 3, kind: input, shape index: {}]
  %s4 = inlined_call_operand.vmem [shape: f32[1,128], index: 4, kind: input, shape index: {}]
  %s5 = inlined_call_operand.vmem [shape: f32[128,128], index: 5, kind: input, shape index: {}]
  %s6 = inlined_call_operand.vmem [shape: f32[1,128], index: 6, kind: input, shape index: {}]
  %s7 = inlined_call_operand.vmem [shape: f32[512,128], index: 7, kind: output, shape index: {}]
  %s8 = sld [smem:[#allocation0]]
  $region61: #{mlp_forward.1} parent=0
    _
  %s10 = ssub.s32 1, %s8
  %s11 = scalar_select 0, %s10, %s8
  loop: start=0, step=1, limit=10
  $region2: #{mlp_forward.1} parent=0 // loop_pre_header
    _
  $region3: #{mlp_forward.1} parent=0 // loop_header
    %s13 = sphi 0, %s17
    %p14 = scmp.ge.s32.totalorder %s13, 10
    %s23 = sphi 0, %s25
    %s26 = sphi 0, %s23
    %s27 = sphi 0, %s26
    %s43 = sphi 0, %s27
    %s47 = sphi 0, %s47
    %s49 = sphi 0, %s47
    %s50 = sphi 0, %s49
    %s64 = sphi 0, %s50
    %s68 = sphi 0, %s68
    %s70 = sphi 0, %s68
    %s71 = sphi 0, %s70
    %s85 = sphi 0, %s71
    %s89 = sphi 0, %s89
    %s91 = sphi 0, %s89
    %s92 = sphi 0, %s91
    %s106 = sphi 0, %s92
    %s110 = sphi 0, %s110
    %s112 = sphi 0, %s110
    %s113 = sphi 0, %s112
    %s127 = sphi 0, %s113
    %s131 = sphi 0, %s131
    %s133 = sphi 0, %s131
    %s134 = sphi 0, %s133
    %s148 = sphi 0, %s134
    %s152 = sphi 0, %s152
    %s154 = sphi 0, %s152
    %s155 = sphi 0, %s154
    %s169 = sphi 0, %s155
    %s175 = sphi 0, %s177
    %s178 = sphi 0, %s175
    %s179 = sphi 0, %s178
    %s195 = sphi 0, %s179
  $region4: #{mlp_forward.1} parent=0 // loop_header_branch
    %16 = sbr.rel (%p14) target = $region8
  $region5: #{mlp_forward.1} parent=0 // loop_body
    %s18 = ssub.s32 %s13, 1
    %s19 = ssub.s32 %s13, 2
    %s20 = sadd.s32 %s13, 1
    %s21 = ssub.s32 %s13, %s20
    %p22 = scmp.eq.s32.totalorder %s21, 0
    %s24 = sadd.s32 %s23, 1
    %s25 = scalar_select %p22, %s23, %s24
    %p28 = pneg %p22
    %p29 = scmp.eq.s32.totalorder %s13, 7
    %p30 = por %p28, %p29
    %p31 = scmp.ne.s32.totalorder %s23, %s26
    %p32 = scmp.eq.s32.totalorder %s13, 0
    %p33 = por %p31, %p32
    %p34 = scmp.ne.s32.totalorder %s23, %s26
    %p35 = scmp.eq.s32.totalorder %s18, 7
    %p36 = por %p34, %p35
    %p37 = scmp.ne.s32.totalorder %s26, %s27
    %p38 = scmp.eq.s32.totalorder %s18, 0
    %p39 = por %p37, %p38
    %p40 = scmp.ne.s32.totalorder %s26, %s27
    %p41 = scmp.eq.s32.totalorder %s19, 7
    %p42 = por %p40, %p41
    %p44 = scmp.ne.s32.totalorder %s27, %s43
    %p45 = scmp.eq.s32.totalorder %s19, 0
    %p46 = por %p44, %p45
    %s48 = sadd.s32 %s47, 1
    %p51 = scmp.eq.s32.totalorder %s13, 7
    %p52 = scmp.ne.s32.totalorder %s47, %s49
    %p53 = scmp.eq.s32.totalorder %s13, 0
    %p54 = por %p52, %p53
    %p55 = scmp.ne.s32.totalorder %s47, %s49
    %p56 = scmp.eq.s32.totalorder %s18, 7
    %p57 = por %p55, %p56
    %p58 = scmp.ne.s32.totalorder %s49, %s50
    %p59 = scmp.eq.s32.totalorder %s18, 0
    %p60 = por %p58, %p59
    %p61 = scmp.ne.s32.totalorder %s49, %s50
    %p62 = scmp.eq.s32.totalorder %s19, 7
    %p63 = por %p61, %p62
    %p65 = scmp.ne.s32.totalorder %s50, %s64
    %p66 = scmp.eq.s32.totalorder %s19, 0
    %p67 = por %p65, %p66
    %s69 = sadd.s32 %s68, 1
    %p72 = scmp.eq.s32.totalorder %s13, 7
    %p73 = scmp.ne.s32.totalorder %s68, %s70
    %p74 = scmp.eq.s32.totalorder %s13, 0
    %p75 = por %p73, %p74
    %p76 = scmp.ne.s32.totalorder %s68, %s70
    %p77 = scmp.eq.s32.totalorder %s18, 7
    %p78 = por %p76, %p77
    %p79 = scmp.ne.s32.totalorder %s70, %s71
    %p80 = scmp.eq.s32.totalorder %s18, 0
    %p81 = por %p79, %p80
    %p82 = scmp.ne.s32.totalorder %s70, %s71
    %p83 = scmp.eq.s32.totalorder %s19, 7
    %p84 = por %p82, %p83
    %p86 = scmp.ne.s32.totalorder %s71, %s85
    %p87 = scmp.eq.s32.totalorder %s19, 0
    %p88 = por %p86, %p87
    %s90 = sadd.s32 %s89, 1
    %p93 = scmp.eq.s32.totalorder %s13, 7
    %p94 = scmp.ne.s32.totalorder %s89, %s91
    %p95 = scmp.eq.s32.totalorder %s13, 0
    %p96 = por %p94, %p95
    %p97 = scmp.ne.s32.totalorder %s89, %s91
    %p98 = scmp.eq.s32.totalorder %s18, 7
    %p99 = por %p97, %p98
    %p100 = scmp.ne.s32.totalorder %s91, %s92
    %p101 = scmp.eq.s32.totalorder %s18, 0
    %p102 = por %p100, %p101
    %p103 = scmp.ne.s32.totalorder %s91, %s92
    %p104 = scmp.eq.s32.totalorder %s19, 7
    %p105 = por %p103, %p104
    %p107 = scmp.ne.s32.totalorder %s92, %s106
    %p108 = scmp.eq.s32.totalorder %s19, 0
    %p109 = por %p107, %p108
    %s111 = sadd.s32 %s110, 1
    %p114 = scmp.eq.s32.totalorder %s13, 7
    %p115 = scmp.ne.s32.totalorder %s110, %s112
    %p116 = scmp.eq.s32.totalorder %s13, 0
    %p117 = por %p115, %p116
    %p118 = scmp.ne.s32.totalorder %s110, %s112
    %p119 = scmp.eq.s32.totalorder %s18, 7
    %p120 = por %p118, %p119
    %p121 = scmp.ne.s32.totalorder %s112, %s113
    %p122 = scmp.eq.s32.totalorder %s18, 0
    %p123 = por %p121, %p122
    %p124 = scmp.ne.s32.totalorder %s112, %s113
    %p125 = scmp.eq.s32.totalorder %s19, 7
    %p126 = por %p124, %p125
    %p128 = scmp.ne.s32.totalorder %s113, %s127
    %p129 = scmp.eq.s32.totalorder %s19, 0
    %p130 = por %p128, %p129
    %s132 = sadd.s32 %s131, 1
    %p135 = scmp.eq.s32.totalorder %s13, 7
    %p136 = scmp.ne.s32.totalorder %s131, %s133
    %p137 = scmp.eq.s32.totalorder %s13, 0
    %p138 = por %p136, %p137
    %p139 = scmp.ne.s32.totalorder %s131, %s133
    %p140 = scmp.eq.s32.totalorder %s18, 7
    %p141 = por %p139, %p140
    %p142 = scmp.ne.s32.totalorder %s133, %s134
    %p143 = scmp.eq.s32.totalorder %s18, 0
    %p144 = por %p142, %p143
    %p145 = scmp.ne.s32.totalorder %s133, %s134
    %p146 = scmp.eq.s32.totalorder %s19, 7
    %p147 = por %p145, %p146
    %p149 = scmp.ne.s32.totalorder %s134, %s148
    %p150 = scmp.eq.s32.totalorder %s19, 0
    %p151 = por %p149, %p150
    %s153 = sadd.s32 %s152, 1
    %p156 = scmp.eq.s32.totalorder %s13, 7
    %p157 = scmp.ne.s32.totalorder %s152, %s154
    %p158 = scmp.eq.s32.totalorder %s13, 0
    %p159 = por %p157, %p158
    %p160 = scmp.ne.s32.totalorder %s152, %s154
    %p161 = scmp.eq.s32.totalorder %s18, 7
    %p162 = por %p160, %p161
    %p163 = scmp.ne.s32.totalorder %s154, %s155
    %p164 = scmp.eq.s32.totalorder %s18, 0
    %p165 = por %p163, %p164
    %p166 = scmp.ne.s32.totalorder %s154, %s155
    %p167 = scmp.eq.s32.totalorder %s19, 7
    %p168 = por %p166, %p167
    %p170 = scmp.ne.s32.totalorder %s155, %s169
    %p171 = scmp.eq.s32.totalorder %s19, 0
    %p172 = por %p170, %p171
    %s173 = ssub.s32 %s13, %s20
    %p174 = scmp.eq.s32.totalorder %s173, 0
    %s176 = sadd.s32 %s175, 1
    %s177 = scalar_select %p174, %s175, %s176
    %p180 = pneg %p174
    %p181 = scmp.eq.s32.totalorder %s13, 7
    %p182 = por %p180, %p181
    %p183 = scmp.ne.s32.totalorder %s175, %s178
    %p184 = scmp.eq.s32.totalorder %s13, 0
    %p185 = por %p183, %p184
    %p186 = scmp.ne.s32.totalorder %s175, %s178
    %p187 = scmp.eq.s32.totalorder %s18, 7
    %p188 = por %p186, %p187
    %p189 = scmp.ne.s32.totalorder %s178, %s179
    %p190 = scmp.eq.s32.totalorder %s18, 0
    %p191 = por %p189, %p190
    %p192 = scmp.ne.s32.totalorder %s178, %s179
    %p193 = scmp.eq.s32.totalorder %s19, 7
    %p194 = por %p192, %p193
    %p196 = scmp.ne.s32.totalorder %s179, %s195
    %p197 = scmp.eq.s32.totalorder %s19, 0
    %p198 = por %p196, %p197
    %p199 = scmp.le.s32.totalorder 1, %s13
    %p200 = scmp.lt.s32.totalorder %s13, 9
    %p201 = pnand %p199, %p200
    %p202 = pneg %p201
    // Predicated region
    $region9: #{mlp_forward.1} parent=5 // pred_check
      _
    $region10: #{mlp_forward.1} parent=5 // pred_check_branch
      %204 = sbr.rel (%p201) target = $region12
    $region11: #{mlp_forward.1} parent=5 // pred_region
      %s205 = ssub.s32 %s13, 1
      // Predicated region
      $region13: #{mlp_forward.1} parent=11 // pred_check
        %p206 = pneg %p60
      $region14: #{mlp_forward.1} parent=11 // pred_check_branch
        %208 = sbr.rel (%p206) target = $region16
      $region15: #{mlp_forward.1} parent=11 // pred_region
        _
      $region16: #{mlp_forward.1} parent=11 // pred_fallthru
        _
      // Predicated region
      $region17: #{mlp_forward.1} parent=11 // pred_check
        %p209 = pneg %p81
      $region18: #{mlp_forward.1} parent=11 // pred_check_branch
        %211 = sbr.rel (%p209) target = $region20
      $region19: #{mlp_forward.1} parent=11 // pred_region
        _
      $region20: #{mlp_forward.1} parent=11 // pred_fallthru
        _
      // Predicated region
      $region21: #{mlp_forward.1} parent=11 // pred_check
        %p212 = pneg %p102
      $region22: #{mlp_forward.1} parent=11 // pred_check_branch
        %214 = sbr.rel (%p212) target = $region24
      $region23: #{mlp_forward.1} parent=11 // pred_region
        _
      $region24: #{mlp_forward.1} parent=11 // pred_fallthru
        _
      // Predicated region
      $region25: #{mlp_forward.1} parent=11 // pred_check
        %p215 = pneg %p123
      $region26: #{mlp_forward.1} parent=11 // pred_check_branch
        %217 = sbr.rel (%p215) target = $region28
      $region27: #{mlp_forward.1} parent=11 // pred_region
        _
      $region28: #{mlp_forward.1} parent=11 // pred_fallthru
        _
      // Predicated region
      $region29: #{mlp_forward.1} parent=11 // pred_check
        %p218 = pneg %p144
      $region30: #{mlp_forward.1} parent=11 // pred_check_branch
        %220 = sbr.rel (%p218) target = $region32
      $region31: #{mlp_forward.1} parent=11 // pred_region
        _
      $region32: #{mlp_forward.1} parent=11 // pred_fallthru
        _
      // Predicated region
      $region33: #{mlp_forward.1} parent=11 // pred_check
        %p221 = pneg %p165
      $region34: #{mlp_forward.1} parent=11 // pred_check_branch
        %223 = sbr.rel (%p221) target = $region36
      $region35: #{mlp_forward.1} parent=11 // pred_region
        _
      $region36: #{mlp_forward.1} parent=11 // pred_fallthru
        _
    $region12: #{mlp_forward.1} parent=5 // pred_fallthru
      _
    %p224 = scmp.lt.s32.totalorder %s13, 8
    // Predicated region
    $region37: #{mlp_forward.1} parent=5 // pred_check
      %p225 = pneg %p224
    $region38: #{mlp_forward.1} parent=5 // pred_check_branch
      %227 = sbr.rel (%p225) target = $region40
    $region39: #{mlp_forward.1} parent=5 // pred_region
      // Predicated region
      $region41: #{mlp_forward.1} parent=39 // pred_check
        %p228 = pneg %p33
      $region42: #{mlp_forward.1} parent=39 // pred_check_branch
        %230 = sbr.rel (%p228) target = $region44
      $region43: #{mlp_forward.1} parent=39 // pred_region
        %s231 = smul.u32 8, %s13
        %p232 = scmp.lt.s32.totalorder %s231, 63
        %s233 = scalar_select %p232, %s231, 63
        %s234 = smul.addr %s233, 8
        %s235 = scalar_lea.vmem %s0, %s234
        %s236 = smul.u32 8, %s13
      $region44: #{mlp_forward.1} parent=39 // pred_fallthru
        _
    $region40: #{mlp_forward.1} parent=5 // pred_fallthru
      _
    %p237 = scmp.le.s32.totalorder 1, %s13
    %p238 = scmp.lt.s32.totalorder %s13, 9
    %p239 = pnand %p237, %p238
    %p240 = pneg %p239
    // Predicated region
    $region45: #{mlp_forward.1} parent=5 // pred_check
      _
    $region46: #{mlp_forward.1} parent=5 // pred_check_branch
      %242 = sbr.rel (%p239) target = $region48
    $region47: #{mlp_forward.1} parent=5 // pred_region
      %s243 = ssub.s32 %s13, 1
      %s244 = smul.u32 8, %s18
      %p245 = scmp.lt.s32.totalorder %s244, 63
      %s246 = scalar_select %p245, %s244, 63
      %s247 = smul.addr %s246, 8
      %s248 = scalar_lea.vmem %s0, %s247
      %p249 = pneg %p39
      %p250 = pneg %p36
      %p251 = pneg %p60
      %p252 = pneg %p57
      %p253 = pneg %p81
      %p254 = pneg %p78
      %p255 = pneg %p102
      %p256 = pneg %p99
      %p257 = pneg %p123
      %p258 = pneg %p120
      %p259 = pneg %p144
      %p260 = pneg %p141
      %p261 = pneg %p165
      %p262 = pneg %p162
      %p263 = pneg %p191
      %p264 = pneg %p188
      %s265 = smul.u32 8, %s18
      %p266 = scmp.lt.s32.totalorder %s265, 63
      %s267 = scalar_select %p266, %s265, 63
      %s268 = smul.addr %s267, 8
      %s269 = scalar_lea.vmem %s7, %s268
      %s270 = smul.u32 8, %s18
      %p271 = scmp.lt.s32.totalorder %s270, 63
      %s272 = scalar_select %p271, %s270, 63
      %s273 = smul.addr %s272, 8
      %s274 = scalar_lea.vmem %s0, %s273
      %s275 = smul.u32 8, %s18
      %s276 = smul.u32 8, %s18
      %p277 = scmp.lt.s32.totalorder %s276, 63
      %s278 = scalar_select %p277, %s276, 63
      %s279 = smul.addr %s278, 8
      %s280 = scalar_lea.vmem %s7, %s279
      %s281 = smul.u32 8, %s18
      %v282 = vld [vmem:[%s274] sm:$0xff]
      %v283 = vld [vmem:[%s274 + $0x8] sm:$0xff]
      %v284 = vld [vmem:[%s274 + $0x10] sm:$0xff]
      %v285 = vld [vmem:[%s274 + $0x18] sm:$0xff]
      %v286 = vld [vmem:[%s274 + $0x20] sm:$0xff]
      %v287 = vld [vmem:[%s274 + $0x28] sm:$0xff]
      %v288 = vld [vmem:[%s274 + $0x30] sm:$0xff]
      %v289 = vld [vmem:[%s274 + $0x38] sm:$0xff]
      %v290 = vld [vmem:[%s1] sm:$0xff]
      %v291 = vld [vmem:[%s1 + $0x8] sm:$0xff]
      %v292 = vld [vmem:[%s2] sm:$0x1]
      %v294 = vperm.slane %v292, 0
      %vm296 = vcmask 130048
      %v298 = vsel %vm296, %v282, 0
      %v301 = vsel %vm296, %v283, 0
      %v304 = vsel %vm296, %v284, 0
      %v307 = vsel %vm296, %v285, 0
      %v310 = vsel %vm296, %v286, 0
      %v313 = vsel %vm296, %v287, 0
      %v316 = vsel %vm296, %v288, 0
      %v319 = vsel %vm296, %v289, 0
      %321 = vmatpush.msra.mxu0 0.0
      %322 = vmatpush.msra.mxu0 0.0
      %323 = vmatpush.msra.mxu0 0.0
      %324 = vmatpush.msra.mxu0 0.0
      %325 = vmatpush.msra.mxu0 0.0
      %326 = vmatpush.msra.mxu0 0.0
      %327 = vmatpush.msra.mxu0 0.0
      %328 = vmatpush.msra.mxu0 0.0
      %329 = vmatpush.msra.mxu0 0.0
      %330 = vmatpush.msra.mxu0 0.0
      %331 = vmatpush.msra.mxu0 0.0
      %332 = vmatpush.msra.mxu0 0.0
      %333 = vmatpush.msra.mxu0 0.0
      %334 = vmatpush.msra.mxu0 0.0
      %335 = vmatpush.msra.mxu0 %v291
      %336 = vmatpush.msra.mxu0 %v290
      %337 = vmatmul.f32.gmra.mxu0 %v298
      %v338 = vpop.f32.mrf.mxu0
      %v339 = vadd.f32 %v294, %v338
      %340 = vmatmul.f32.gmra.mxu0 %v301
      %v341 = vpop.f32.mrf.mxu0
      %v342 = vadd.f32 %v294, %v341
      %343 = vmatmul.f32.gmra.mxu0 %v304
      %v344 = vpop.f32.mrf.mxu0
      %v345 = vadd.f32 %v294, %v344
      %346 = vmatmul.f32.gmra.mxu0 %v307
      %v347 = vpop.f32.mrf.mxu0
      %v348 = vadd.f32 %v294, %v347
      %349 = vmatmul.f32.gmra.mxu0 %v310
      %v350 = vpop.f32.mrf.mxu0
      %v351 = vadd.f32 %v294, %v350
      %352 = vmatmul.f32.gmra.mxu0 %v313
      %v353 = vpop.f32.mrf.mxu0
      %v354 = vadd.f32 %v294, %v353
      %355 = vmatmul.f32.gmra.mxu0 %v316
      %v356 = vpop.f32.mrf.mxu0
      %v357 = vadd.f32 %v294, %v356
      %358 = vmatmul.f32.gmra.mxu0 %v319
      %v359 = vpop.f32.mrf.mxu0
      %v360 = vadd.f32 %v294, %v359
      %361 = vdwg.mxu0
      %v362 = vmax.f32 %v339, 0.0
      %v363 = vmax.f32 %v342, 0.0
      %v364 = vmax.f32 %v345, 0.0
      %v365 = vmax.f32 %v348, 0.0
      %v366 = vmax.f32 %v351, 0.0
      %v367 = vmax.f32 %v354, 0.0
      %v368 = vmax.f32 %v357, 0.0
      %v369 = vmax.f32 %v360, 0.0
      %v370 = vld [vmem:[%s3] sm:$0xff]
      %v371 = vld [vmem:[%s3 + $0x8] sm:$0xff]
      %v372 = vld [vmem:[%s3 + $0x10] sm:$0xff]
      %v373 = vld [vmem:[%s3 + $0x18] sm:$0xff]
      %v374 = vld [vmem:[%s3 + $0x20] sm:$0xff]
      %v375 = vld [vmem:[%s3 + $0x28] sm:$0xff]
      %v376 = vld [vmem:[%s3 + $0x30] sm:$0xff]
      %v377 = vld [vmem:[%s3 + $0x38] sm:$0xff]
      %v378 = vld [vmem:[%s3 + $0x40] sm:$0xff]
      %v379 = vld [vmem:[%s3 + $0x48] sm:$0xff]
      %v380 = vld [vmem:[%s3 + $0x50] sm:$0xff]
      %v381 = vld [vmem:[%s3 + $0x58] sm:$0xff]
      %v382 = vld [vmem:[%s3 + $0x60] sm:$0xff]
      %v383 = vld [vmem:[%s3 + $0x68] sm:$0xff]
      %v384 = vld [vmem:[%s3 + $0x70] sm:$0xff]
      %v385 = vld [vmem:[%s3 + $0x78] sm:$0xff]
      %v386 = vld [vmem:[%s4] sm:$0x1]
      %v388 = vperm.slane %v386, 0
      %390 = vmatpush.msra.mxu0 %v385
      %391 = vmatpush.msra.mxu0 %v384
      %392 = vmatpush.msra.mxu0 %v383
      %393 = vmatpush.msra.mxu0 %v382
      %394 = vmatpush.msra.mxu0 %v381
      %395 = vmatpush.msra.mxu0 %v380
      %396 = vmatpush.msra.mxu0 %v379
      %397 = vmatpush.msra.mxu0 %v378
      %398 = vmatpush.msra.mxu0 %v377
      %399 = vmatpush.msra.mxu0 %v376
      %400 = vmatpush.msra.mxu0 %v375
      %401 = vmatpush.msra.mxu0 %v374
      %402 = vmatpush.msra.mxu0 %v373
      %403 = vmatpush.msra.mxu0 %v372
      %404 = vmatpush.msra.mxu0 %v371
      %405 = vmatpush.msra.mxu0 %v370
      %406 = vmatmul.f32.gmra.mxu0 %v362
      %v407 = vpop.f32.mrf.mxu0
      %v408 = vadd.f32 %v388, %v407
      %409 = vmatmul.f32.gmra.mxu0 %v363
      %v410 = vpop.f32.mrf.mxu0
      %v411 = vadd.f32 %v388, %v410
      %412 = vmatmul.f32.gmra.mxu0 %v364
      %v413 = vpop.f32.mrf.mxu0
      %v414 = vadd.f32 %v388, %v413
      %415 = vmatmul.f32.gmra.mxu0 %v365
      %v416 = vpop.f32.mrf.mxu0
      %v417 = vadd.f32 %v388, %v416
      %418 = vmatmul.f32.gmra.mxu0 %v366
      %v419 = vpop.f32.mrf.mxu0
      %v420 = vadd.f32 %v388, %v419
      %421 = vmatmul.f32.gmra.mxu0 %v367
      %v422 = vpop.f32.mrf.mxu0
      %v423 = vadd.f32 %v388, %v422
      %424 = vmatmul.f32.gmra.mxu0 %v368
      %v425 = vpop.f32.mrf.mxu0
      %v426 = vadd.f32 %v388, %v425
      %427 = vmatmul.f32.gmra.mxu0 %v369
      %v428 = vpop.f32.mrf.mxu0
      %v429 = vadd.f32 %v388, %v428
      %430 = vdwg.mxu0
      %v431 = vmax.f32 %v408, 0.0
      %v432 = vmax.f32 %v411, 0.0
      %v433 = vmax.f32 %v414, 0.0
      %v434 = vmax.f32 %v417, 0.0
      %v435 = vmax.f32 %v420, 0.0
      %v436 = vmax.f32 %v423, 0.0
      %v437 = vmax.f32 %v426, 0.0
      %v438 = vmax.f32 %v429, 0.0
      %v439 = vld [vmem:[%s5] sm:$0xff]
      %v440 = vld [vmem:[%s5 + $0x8] sm:$0xff]
      %v441 = vld [vmem:[%s5 + $0x10] sm:$0xff]
      %v442 = vld [vmem:[%s5 + $0x18] sm:$0xff]
      %v443 = vld [vmem:[%s5 + $0x20] sm:$0xff]
      %v444 = vld [vmem:[%s5 + $0x28] sm:$0xff]
      %v445 = vld [vmem:[%s5 + $0x30] sm:$0xff]
      %v446 = vld [vmem:[%s5 + $0x38] sm:$0xff]
      %v447 = vld [vmem:[%s5 + $0x40] sm:$0xff]
      %v448 = vld [vmem:[%s5 + $0x48] sm:$0xff]
      %v449 = vld [vmem:[%s5 + $0x50] sm:$0xff]
      %v450 = vld [vmem:[%s5 + $0x58] sm:$0xff]
      %v451 = vld [vmem:[%s5 + $0x60] sm:$0xff]
      %v452 = vld [vmem:[%s5 + $0x68] sm:$0xff]
      %v453 = vld [vmem:[%s5 + $0x70] sm:$0xff]
      %v454 = vld [vmem:[%s5 + $0x78] sm:$0xff]
      %v455 = vld [vmem:[%s6] sm:$0x1]
      %v457 = vperm.slane %v455, 0
      %459 = vmatpush.msra.mxu0 %v454
      %460 = vmatpush.msra.mxu0 %v453
      %461 = vmatpush.msra.mxu0 %v452
      %462 = vmatpush.msra.mxu0 %v451
      %463 = vmatpush.msra.mxu0 %v450
      %464 = vmatpush.msra.mxu0 %v449
      %465 = vmatpush.msra.mxu0 %v448
      %466 = vmatpush.msra.mxu0 %v447
      %467 = vmatpush.msra.mxu0 %v446
      %468 = vmatpush.msra.mxu0 %v445
      %469 = vmatpush.msra.mxu0 %v444
      %470 = vmatpush.msra.mxu0 %v443
      %471 = vmatpush.msra.mxu0 %v442
      %472 = vmatpush.msra.mxu0 %v441
      %473 = vmatpush.msra.mxu0 %v440
      %474 = vmatpush.msra.mxu0 %v439
      %475 = vmatmul.f32.gmra.mxu0 %v431
      %v476 = vpop.f32.mrf.mxu0
      %v477 = vadd.f32 %v457, %v476
      %478 = vmatmul.f32.gmra.mxu0 %v432
      %v479 = vpop.f32.mrf.mxu0
      %v480 = vadd.f32 %v457, %v479
      %481 = vmatmul.f32.gmra.mxu0 %v433
      %v482 = vpop.f32.mrf.mxu0
      %v483 = vadd.f32 %v457, %v482
      %484 = vmatmul.f32.gmra.mxu0 %v434
      %v485 = vpop.f32.mrf.mxu0
      %v486 = vadd.f32 %v457, %v485
      %487 = vmatmul.f32.gmra.mxu0 %v435
      %v488 = vpop.f32.mrf.mxu0
      %v489 = vadd.f32 %v457, %v488
      %490 = vmatmul.f32.gmra.mxu0 %v436
      %v491 = vpop.f32.mrf.mxu0
      %v492 = vadd.f32 %v457, %v491
      %493 = vmatmul.f32.gmra.mxu0 %v437
      %v494 = vpop.f32.mrf.mxu0
      %v495 = vadd.f32 %v457, %v494
      %496 = vmatmul.f32.gmra.mxu0 %v438
      %v497 = vpop.f32.mrf.mxu0
      %v498 = vadd.f32 %v457, %v497
      %499 = vdwg.mxu0
      %500 = vst [vmem:[%s280] sm:$0xff] %v477
      %501 = vst [vmem:[%s280 + $0x8] sm:$0xff] %v480
      %502 = vst [vmem:[%s280 + $0x10] sm:$0xff] %v483
      %503 = vst [vmem:[%s280 + $0x18] sm:$0xff] %v486
      %504 = vst [vmem:[%s280 + $0x20] sm:$0xff] %v489
      %505 = vst [vmem:[%s280 + $0x28] sm:$0xff] %v492
      %506 = vst [vmem:[%s280 + $0x30] sm:$0xff] %v495
      %507 = vst [vmem:[%s280 + $0x38] sm:$0xff] %v498
      %s508 = smul.u32 8, %s18
      %p509 = scmp.lt.s32.totalorder %s508, 63
      %s510 = scalar_select %p509, %s508, 63
      %s511 = smul.addr %s510, 8
      %s512 = scalar_lea.vmem %s7, %s511
      // Predicated region
      $region49: #{mlp_forward.1} parent=47 // pred_check
        %p513 = pneg %p188
      $region50: #{mlp_forward.1} parent=47 // pred_check_branch
        %515 = sbr.rel (%p513) target = $region52
      $region51: #{mlp_forward.1} parent=47 // pred_region
        %s516 = smul.u32 8, %s18
      $region52: #{mlp_forward.1} parent=47 // pred_fallthru
        _
    $region48: #{mlp_forward.1} parent=5 // pred_fallthru
      _
    %p517 = scmp.le.s32.totalorder 2, %s13
    // Predicated region
    $region53: #{mlp_forward.1} parent=5 // pred_check
      %p518 = pneg %p517
    $region54: #{mlp_forward.1} parent=5 // pred_check_branch
      %520 = sbr.rel (%p518) target = $region56
    $region55: #{mlp_forward.1} parent=5 // pred_region
      %s521 = ssub.s32 %s13, 2
      // Predicated region
      $region57: #{mlp_forward.1} parent=55 // pred_check
        %p522 = pneg %p194
      $region58: #{mlp_forward.1} parent=55 // pred_check_branch
        %524 = sbr.rel (%p522) target = $region60
      $region59: #{mlp_forward.1} parent=55 // pred_region
        %s525 = smul.u32 8, %s19
        %p526 = scmp.lt.s32.totalorder %s525, 63
        %s527 = scalar_select %p526, %s525, 63
        %s528 = smul.addr %s527, 8
        %s529 = scalar_lea.vmem %s7, %s528
      $region60: #{mlp_forward.1} parent=55 // pred_fallthru
        _
    $region56: #{mlp_forward.1} parent=5 // pred_fallthru
      _
  $region6: #{mlp_forward.1} parent=0 // loop_footer
    %s17 = sadd.s32 1, %s13
  $region7: #{mlp_forward.1} parent=0 // loop_footer_branch
    %12 = sbr.rel target = $region3
  $region8: #{mlp_forward.1} parent=0 // loop_exit
    _

</llo_original>
